<compile_context>
chip_gen: v6e
topology: v6e:2x2x1
jax: 0.10.0
libtpu: 0.0.40
codegen_flags: <defaults>
</compile_context>

<pallas_src>
import math
import numpy as np

import jax
import jax.numpy as jnp
from jax.experimental import pallas as pl
from jax.experimental.pallas import tpu as pltpu


_GELU_C = math.sqrt(2.0 / math.pi)


# ----------------------------------------------------------------------------
# Tile / group selection helpers
# ----------------------------------------------------------------------------

def _tile(dim, cap, quantum):
    """Pick a block size for `dim`: the full dim if it fits the cap, otherwise the
    largest multiple of `quantum` <= cap that divides dim (else the full dim)."""
    if dim <= cap:
        return dim
    t = (cap // quantum) * quantum
    while t >= quantum:
        if dim % t == 0:
            return t
        t -= quantum
    return dim


def _largest_divisor(n, cap):
    cap = max(1, min(n, cap))
    for d in range(cap, 0, -1):
        if n % d == 0:
            return d
    return 1


def _group_block(G, per_group_bytes, budget_bytes=8 << 20, cap=256,
                 ensure_multi_step=True):
    """Number of groups per grid step, sized against a VMEM byte budget.
    When `ensure_multi_step`, keep >=2 grid steps (megacore sharding on v7x)."""
    gb = max(1, min(cap, int(budget_bytes // max(per_group_bytes, 1))))
    gb = _largest_divisor(G, min(G, gb))
    if ensure_multi_step and G >= 2 and G // gb < 2:
        gb = _largest_divisor(G, max(1, G // 2))
    return gb


# ----------------------------------------------------------------------------
# Fused tiled linear: y = [res +] [g *] post_act(x @ W + b)
# ----------------------------------------------------------------------------

def _make_linear_kernel(post_act, has_gate, has_res):
    def kernel(*refs):
        x_ref, w_ref, b_ref = refs[0], refs[1], refs[2]
        idx = 3
        g_ref = None
        r_ref = None
        if has_gate:
            g_ref = refs[idx]; idx += 1
        if has_res:
            r_ref = refs[idx]; idx += 1
        o_ref, acc_ref = refs[idx], refs[idx + 1]

        k = pl.program_id(2)

        @pl.when(k == 0)
        def _():
            acc_ref[...] = jnp.zeros_like(acc_ref)

        xv = x_ref[...]
        if xv.dtype != jnp.bfloat16:
            xv = xv.astype(jnp.bfloat16)
        wv = w_ref[...]
        if wv.dtype != jnp.bfloat16:
            wv = wv.astype(jnp.bfloat16)
        # bf16 MXU operands, f32 accumulation.
        acc_ref[...] += jnp.dot(xv, wv, preferred_element_type=jnp.float32)

        @pl.when(k == pl.num_programs(2) - 1)
        def _():
            y = acc_ref[...] + b_ref[...].astype(jnp.float32)
            if post_act == "silu":
                y = y * jax.nn.sigmoid(y)
            elif post_act == "gelu_tanh":
                y = 0.5 * y * (1.0 + jnp.tanh(_GELU_C * (y + 0.044715 * y * y * y)))
            if has_gate:
                y = g_ref[...].astype(jnp.float32) * y
            if has_res:
                y = r_ref[...].astype(jnp.float32) + y
            o_ref[...] = y.astype(o_ref.dtype)

    return kernel


def linear(x, w, b, post_act=None, out_dtype=jnp.float32,
           gate=None, residual=None, rows_per_batch=None):
    """y = [residual +] [gate *] post_act(x @ w + b).
    x has arbitrary leading dims; gate is (B, N) per-batch-row; residual matches y."""
    orig_shape = x.shape
    K = orig_shape[-1]
    M = int(np.prod(orig_shape[:-1]))
    N = w.shape[1]
    x2 = x.reshape(M, K)
    b2 = b.reshape(1, N).astype(jnp.float32)

    has_gate = gate is not None
    has_res = residual is not None

    if has_gate:
        # Keep each row tile inside one batch so the gate row is unique per tile.
        rpb = int(rows_per_batch)
        tm = _tile(rpb, 256, 8)
    else:
        rpb = None
        tm = _tile(M, 256, 8)
    tn = _tile(N, 512, 128)
    tk = _tile(K, 512, 128)
    grid = (M // tm, N // tn, K // tk)

    in_specs = [
        pl.BlockSpec((tm, tk), lambda i, j, k: (i, k)),
        pl.BlockSpec((tk, tn), lambda i, j, k: (k, j)),
        pl.BlockSpec((1, tn), lambda i, j, k: (0, j)),
    ]
    args = [x2, w, b2]
    if has_gate:
        in_specs.append(
            pl.BlockSpec((1, tn), lambda i, j, k: ((i * tm) // rpb, j)))
        args.append(gate)
    if has_res:
        in_specs.append(pl.BlockSpec((tm, tn), lambda i, j, k: (i, j)))
        args.append(residual.reshape(M, N))

    flops = 2 * M * N * K
    bytes_accessed = (M * K * np.dtype(x.dtype).itemsize
                      + K * N * np.dtype(w.dtype).itemsize
                      + M * N * np.dtype(out_dtype).itemsize + 4 * N)
    if has_res:
        bytes_accessed += 4 * M * N

    out = pl.pallas_call(
        _make_linear_kernel(post_act, has_gate, has_res),
        grid=grid,
        in_specs=in_specs,
        out_specs=pl.BlockSpec((tm, tn), lambda i, j, k: (i, j)),
        out_shape=jax.ShapeDtypeStruct((M, N), out_dtype),
        scratch_shapes=[pltpu.VMEM((tm, tn), jnp.float32)],
        compiler_params=pltpu.CompilerParams(
            dimension_semantics=("parallel", "parallel", "arbitrary")),
        cost_estimate=pl.CostEstimate(
            flops=flops, transcendentals=0, bytes_accessed=bytes_accessed),
    )(*args)
    return out.reshape(orig_shape[:-1] + (N,))


# ----------------------------------------------------------------------------
# LayerNorm (no affine, eps=1e-6) and fused LayerNorm + adaLN modulate
# Outputs are bf16: every consumer is a matmul that wants bf16 operands.
# ----------------------------------------------------------------------------

def _ln_kernel(x_ref, o_ref):
    x = x_ref[...].astype(jnp.float32)
    mu = jnp.mean(x, axis=-1, keepdims=True)
    xc = x - mu
    var = jnp.mean(xc * xc, axis=-1, keepdims=True)
    o_ref[...] = (xc * jax.lax.rsqrt(var + 1e-6)).astype(o_ref.dtype)


def layernorm(x, out_dtype=jnp.bfloat16):
    shape = x.shape
    C = shape[-1]
    M = int(np.prod(shape[:-1]))
    x2 = x.reshape(M, C)
    tm = _tile(M, 512, 8)
    out = pl.pallas_call(
        _ln_kernel,
        grid=(M // tm,),
        in_specs=[pl.BlockSpec((tm, C), lambda i: (i, 0))],
        out_specs=pl.BlockSpec((tm, C), lambda i: (i, 0)),
        out_shape=jax.ShapeDtypeStruct((M, C), out_dtype),
        compiler_params=pltpu.CompilerParams(dimension_semantics=("parallel",)),
    )(x2)
    return out.reshape(shape)


def _ln_mod_kernel(x_ref, shift_ref, scale_ref, o_ref):
    x = x_ref[...].astype(jnp.float32)                   # (1, tm, D)
    mu = jnp.mean(x, axis=-1, keepdims=True)
    xc = x - mu
    var = jnp.mean(xc * xc, axis=-1, keepdims=True)
    xn = xc * jax.lax.rsqrt(var + 1e-6)
    sh = shift_ref[...].astype(jnp.float32)[:, None, :]  # (1, 1, D)
    sc = scale_ref[...].astype(jnp.float32)[:, None, :]
    o_ref[...] = (xn * (1.0 + sc) + sh).astype(o_ref.dtype)


def layernorm_modulate(x, shift, scale, out_dtype=jnp.bfloat16):
    """LN over last dim then x*(1+scale)+shift, shift/scale per batch row."""
    B, T, D = x.shape
    tm = _tile(T, 256, 8)
    return pl.pallas_call(
        _ln_mod_kernel,
        grid=(B, T // tm),
        in_specs=[
            pl.BlockSpec((1, tm, D), lambda b, i: (b, i, 0)),
            pl.BlockSpec((1, D), lambda b, i: (b, 0)),
            pl.BlockSpec((1, D), lambda b, i: (b, 0)),
        ],
        out_specs=pl.BlockSpec((1, tm, D), lambda b, i: (b, i, 0)),
        out_shape=jax.ShapeDtypeStruct((B, T, D), out_dtype),
        compiler_params=pltpu.CompilerParams(
            dimension_semantics=("parallel", "parallel")),
    )(x, shift, scale)


# ----------------------------------------------------------------------------
# Attention kernels (fused qkv / kv inputs, bf16 I/O, scale folded into q)
# ----------------------------------------------------------------------------

def _make_self_attn_kernel(scale, H, hd, C):
    def kernel(qkv_ref, o_ref):
        qkv = qkv_ref[...]                               # (Gb, L, 3C)
        if qkv.dtype != jnp.bfloat16:
            qkv = qkv.astype(jnp.bfloat16)
        q_all = qkv[:, :, :C] * scale                    # scale folded into q
        k_all = qkv[:, :, C:2 * C]
        v_all = qkv[:, :, 2 * C:]
        outs = []
        for h in range(H):
            lo, hi = h * hd, (h + 1) * hd
            s = jnp.einsum("gqd,gkd->gqk", q_all[:, :, lo:hi], k_all[:, :, lo:hi],
                           preferred_element_type=jnp.float32)
            m = jnp.max(s, axis=-1, keepdims=True)
            p = jnp.exp(s - m)
            denom = jnp.sum(p, axis=-1, keepdims=True)
            o = jnp.einsum("gqk,gkd->gqd", p.astype(jnp.bfloat16), v_all[:, :, lo:hi],
                           preferred_element_type=jnp.float32)
            # NOTE: approx reciprocal (EUP) -- tiny deviation vs exact division.
            outs.append(o * pl.reciprocal(denom, approx=True))
        o_ref[...] = jnp.concatenate(outs, axis=-1).astype(o_ref.dtype)

    return kernel


def self_attention_fused_qkv(qkv, scale, H):
    """qkv: (G, L, 3C) with [q|k|v] layout on the last dim; returns (G, L, C) bf16."""
    G, L, C3 = qkv.shape
    C = C3 // 3
    hd = C // H
    per_group = 24 * L * C + 12 * L * L
    Gb = _group_block(G, per_group, ensure_multi_step=True)
    flops = 4 * G * H * L * L * hd
    return pl.pallas_call(
        _make_self_attn_kernel(scale, H, hd, C),
        grid=(G // Gb,),
        in_specs=[pl.BlockSpec((Gb, L, C3), lambda g: (g, 0, 0))],
        out_specs=pl.BlockSpec((Gb, L, C), lambda g: (g, 0, 0)),
        out_shape=jax.ShapeDtypeStruct((G, L, C), jnp.bfloat16),
        compiler_params=pltpu.CompilerParams(dimension_semantics=("parallel",)),
        cost_estimate=pl.CostEstimate(
            flops=flops, transcendentals=G * H * L * L,
            bytes_accessed=2 * (G * L * C3 + G * L * C)),
    )(qkv)


def _make_spatial_ca_kernel(scale, H, hd, C):
    # Lq == 1 per group: MXU would see 1-row matmuls, so compute scores and p.V on
    # the VPU/XLU (broadcast multiply + reduce); P is the softmax axis.
    def kernel(q_ref, kv_ref, o_ref):
        q = q_ref[...].astype(jnp.float32) * scale       # (Gb, C)
        kv = kv_ref[...].astype(jnp.float32)             # (Gb, P, 2C)
        outs = []
        for h in range(H):
            lo, hi = h * hd, (h + 1) * hd
            qh = q[:, lo:hi]                             # (Gb, hd)
            kh = kv[:, :, lo:hi]                         # (Gb, P, hd)
            vh = kv[:, :, C + lo:C + hi]                 # (Gb, P, hd)
            s = jnp.sum(qh[:, None, :] * kh, axis=-1)    # (Gb, P)
            m = jnp.max(s, axis=-1, keepdims=True)
            p = jnp.exp(s - m)
            denom = jnp.sum(p, axis=-1, keepdims=True)
            p = p * pl.reciprocal(denom, approx=True)
            outs.append(jnp.sum(p[:, :, None] * vh, axis=1))   # (Gb, hd)
        o_ref[...] = jnp.concatenate(outs, axis=-1).astype(o_ref.dtype)

    return kernel


def spatial_cross_attention(q, kv, scale, H):
    """q: (G, C) one query per group; kv: (G, P, 2C) with [k|v] layout -> (G, C) bf16."""
    G, C = q.shape
    P = kv.shape[1]
    hd = C // H
    per_group = 20 * P * C + 16 * C
    Gb = _group_block(G, per_group, ensure_multi_step=True)
    return pl.pallas_call(
        _make_spatial_ca_kernel(scale, H, hd, C),
        grid=(G // Gb,),
        in_specs=[
            pl.BlockSpec((Gb, C), lambda g: (g, 0)),
            pl.BlockSpec((Gb, P, 2 * C), lambda g: (g, 0, 0)),
        ],
        out_specs=pl.BlockSpec((Gb, C), lambda g: (g, 0)),
        out_shape=jax.ShapeDtypeStruct((G, C), jnp.bfloat16),
        compiler_params=pltpu.CompilerParams(dimension_semantics=("parallel",)),
        cost_estimate=pl.CostEstimate(
            flops=4 * G * P * C, transcendentals=G * H * P,
            bytes_accessed=2 * (G * C + G * P * 2 * C + G * C)),
    )(q, kv)


def _make_temporal_ca_kernel(scale, H, hd, C, Pg, P):
    inv_p = 1.0 / float(P)

    def kernel(q_ref, kv_ref, o_ref, acc_ref):
        j = pl.program_id(1)

        @pl.when(j == 0)
        def _():
            acc_ref[...] = jnp.zeros_like(acc_ref)

        q = q_ref[0]
        if q.dtype != jnp.bfloat16:
            q = q.astype(jnp.bfloat16)
        q = q * scale                                    # (T, C), shared across P groups
        kv = kv_ref[0]
        if kv.dtype != jnp.bfloat16:
            kv = kv.astype(jnp.bfloat16)
        k_all = kv[:, :, :C]                             # (Pg, T, C)
        v_all = kv[:, :, C:]

        heads = []
        for h in range(H):
            lo, hi = h * hd, (h + 1) * hd
            qh = q[:, lo:hi]                             # (T, hd)
            kh = k_all[:, :, lo:hi]                      # (Pg, T, hd)
            vh = v_all[:, :, lo:hi]
            qb = jnp.broadcast_to(qh[None], (Pg,) + qh.shape)   # no HBM repeat
            s = jnp.einsum("pqd,pkd->pqk", qb, kh,
                           preferred_element_type=jnp.float32)
            m = jnp.max(s, axis=-1, keepdims=True)
            p = jnp.exp(s - m)
            denom = jnp.sum(p, axis=-1, keepdims=True)
            o = jnp.einsum("pqk,pkd->pqd", p.astype(jnp.bfloat16), vh,
                           preferred_element_type=jnp.float32)
            o = o * pl.reciprocal(denom, approx=True)
            heads.append(jnp.sum(o, axis=0))             # sum over local P groups
        acc_ref[...] += jnp.concatenate(heads, axis=-1)

        @pl.when(j == pl.num_programs(1) - 1)
        def _():
            o_ref[0] = (acc_ref[...] * inv_p).astype(o_ref.dtype)

    return kernel


def temporal_cross_attention(q, kv, scale, H):
    """q: (B, T, C) shared across P groups; kv: (B, P, T, 2C) with [k|v] layout.
    Returns the mean over P of per-group attention outputs: (B, T, C) bf16."""
    B, T, C = q.shape
    P = kv.shape[1]
    hd = C // H
    per_group = 20 * T * C + 12 * H * T * T
    Pg = _group_block(P, per_group, ensure_multi_step=False)
    return pl.pallas_call(
        _make_temporal_ca_kernel(scale, H, hd, C, Pg, P),
        grid=(B, P // Pg),
        in_specs=[
            pl.BlockSpec((1, T, C), lambda b, j: (b, 0, 0)),        # q broadcast over P
            pl.BlockSpec((1, Pg, T, 2 * C), lambda b, j: (b, j, 0, 0)),
        ],
        out_specs=pl.BlockSpec((1, T, C), lambda b, j: (b, 0, 0)),  # mean fused (acc)
        out_shape=jax.ShapeDtypeStruct((B, T, C), jnp.bfloat16),
        scratch_shapes=[pltpu.VMEM((T, C), jnp.float32)],
        compiler_params=pltpu.CompilerParams(
            dimension_semantics=("parallel", "arbitrary")),
        cost_estimate=pl.CostEstimate(
            flops=4 * B * P * H * T * T * hd, transcendentals=B * P * H * T * T,
            bytes_accessed=2 * (B * T * C + B * P * T * 2 * C + B * T * C)),
    )(q, kv)


# ----------------------------------------------------------------------------
# DiT model (glue in plain JAX, compute in Pallas)
# ----------------------------------------------------------------------------

def get_1d_sincos_pos_embed_from_grid(embed_dim, pos):
    assert embed_dim % 2 == 0
    omega = np.arange(embed_dim // 2, dtype=np.float64)
    omega /= embed_dim / 2.0
    omega = 1.0 / 10000 ** omega
    pos = pos.reshape(-1)
    out = np.einsum("m,d->md", pos, omega)
    return np.concatenate([np.sin(out), np.cos(out)], axis=1)


def timestep_embedding(t, dim, max_period=10000):
    half = dim // 2
    freqs = jnp.exp(-math.log(max_period) * jnp.arange(half, dtype=jnp.float32) / half)
    args = t[:, None].astype(jnp.float32) * freqs[None]
    return jnp.concatenate([jnp.cos(args), jnp.sin(args)], axis=-1)  # dim is even


def dit_block(p, x, c_silu, y_spatial, y_temporal, spatial, H, scale, T):
    B, _, C = x.shape
    # adaLN: SiLU(c) precomputed once per forward; Linear here.
    mod = linear(c_silu, p["ada_w"], p["ada_b"])                      # (B, 6C) f32
    sh_msa, sc_msa, g_msa, sh_mlp, sc_mlp, g_mlp = jnp.split(mod, 6, axis=-1)

    # --- self-attention branch ---
    h = layernorm_modulate(x, sh_msa, sc_msa)                         # bf16
    qkv = linear(h, p["qkv_w"], p["qkv_b"], out_dtype=jnp.bfloat16)   # (B,T,3C) bf16
    attn = self_attention_fused_qkv(qkv, scale, H)                    # (B,T,C) bf16
    x = linear(attn, p["attn_proj_w"], p["attn_proj_b"],
               gate=g_msa, residual=x, rows_per_batch=T)              # gated residual fused

    # --- cross-attention branch ---
    xn = layernorm(x)                                                 # bf16
    q = linear(xn, p["wq_w"], p["wq_b"], out_dtype=jnp.bfloat16)      # (B,T,C) bf16
    if spatial:
        kv = linear(y_spatial, p["wkv_w"], p["wkv_b"],
                    out_dtype=jnp.bfloat16)                           # (B*T,P,2C) bf16
        o = spatial_cross_attention(q.reshape(B * T, C), kv, scale, H)
        o = o.reshape(B, T, C)
    else:
        kv = linear(y_temporal, p["wkv_w"], p["wkv_b"],
                    out_dtype=jnp.bfloat16)                           # (B,P,T,2C) bf16
        o = temporal_cross_attention(q, kv, scale, H)                 # (B,T,C) bf16
    x = linear(o, p["ca_proj_w"], p["ca_proj_b"], residual=x)         # residual fused

    # --- MLP branch ---
    h = layernorm_modulate(x, sh_mlp, sc_mlp)                         # bf16
    h = linear(h, p["fc1_w"], p["fc1_b"], post_act="gelu_tanh",
               out_dtype=jnp.bfloat16)                                # bf16
    x = linear(h, p["fc2_w"], p["fc2_b"],
               gate=g_mlp, residual=x, rows_per_batch=T)              # gated residual fused
    return x


def dit_forward(params, x, t, y, cfg):
    H = cfg["heads"]
    D = cfg["hidden"]
    hd = D // H
    scale = hd ** (-0.5)

    B = x.shape[0]
    # x: (B, C_in, T) -> (B, T, C_in) -> embed -> (B, T, D)
    x = jnp.transpose(x, (0, 2, 1))
    x = linear(x, params["x_emb_w"], params["x_emb_b"])
    x = x + params["time_embed"]

    # y: (B, T, P, D); time embedding adds along T (same as the reference's
    # rearrange -> add -> rearrange-back). Build both layouts ONCE, cast to bf16 once
    # (they are re-read by the wkv linear of every block).
    Bb, T, P, Dd = y.shape
    y = y + params["time_embed"][:, :, None, :]
    y_spatial = y.reshape(B * T, P, Dd).astype(jnp.bfloat16)          # '(b t) n m'
    y_temporal = jnp.transpose(y, (0, 2, 1, 3)).astype(jnp.bfloat16)  # '(b n) t m'

    # timestep embedder: Linear -> SiLU -> Linear
    t_freq = timestep_embedding(t, cfg["freq"])
    c = linear(t_freq, params["t_mlp0_w"], params["t_mlp0_b"], post_act="silu")
    c = linear(c, params["t_mlp2_w"], params["t_mlp2_b"])
    # SiLU(c) hoisted: computed once (tiny (B,D) elementwise), reused by all adaLN linears.
    c_silu = c * jax.nn.sigmoid(c)

    for i in range(0, cfg["depth"], 2):
        x = dit_block(params["blocks"][i], x, c_silu, y_spatial, y_temporal,
                      True, H, scale, T)
        x = dit_block(params["blocks"][i + 1], x, c_silu, y_spatial, y_temporal,
                      False, H, scale, T)

    # final layer
    fp = params["final"]
    mod = linear(c_silu, fp["ada_w"], fp["ada_b"])
    shift, sc = jnp.split(mod, 2, axis=-1)
    xf = layernorm_modulate(x, shift, sc)
    xf = linear(xf, fp["lin_w"], fp["lin_b"])
    return jnp.transpose(xf, (0, 2, 1))  # (B, out_channels, T)


# ----------------------------------------------------------------------------
# Deterministic parameter init (shapes from the module's __init__; values synthetic).
# Weights stored bf16 (halves weight DMA); biases / positional embed stay f32.
# ----------------------------------------------------------------------------

def init_params(key, cfg):
    D = cfg["hidden"]
    Cin = cfg["in_ch"]
    Cout = cfg["out_ch"]
    Fq = cfg["freq"]
    mlp_h = int(D * cfg["mlp_ratio"])

    keys = iter(jax.random.split(key, 256))

    def w(shape, s=0.02):
        return (s * jax.random.normal(next(keys), shape)).astype(jnp.bfloat16)

    def bvec(shape, s=0.02):
        return (s * jax.random.normal(next(keys), shape)).astype(jnp.float32)

    params = {
        "x_emb_w": w((Cin, D)), "x_emb_b": bvec((D,)),
        "t_mlp0_w": w((Fq, D)), "t_mlp0_b": bvec((D,)),
        "t_mlp2_w": w((D, D)), "t_mlp2_b": bvec((D,)),
        "time_embed": jnp.asarray(
            get_1d_sincos_pos_embed_from_grid(D, np.arange(cfg["T"])), jnp.float32
        )[None],
        "blocks": [],
        "final": {
            "lin_w": w((D, Cout)), "lin_b": bvec((Cout,)),
            "ada_w": w((D, 2 * D)), "ada_b": bvec((2 * D,)),
        },
    }
    # NOTE: the reference zero-inits adaLN and final-linear weights (trivially zero path);
    # here they are small random so the kernels are actually exercised.
    for _ in range(cfg["depth"]):
        params["blocks"].append({
            "qkv_w": w((D, 3 * D)), "qkv_b": bvec((3 * D,)),
            "attn_proj_w": w((D, D)), "attn_proj_b": bvec((D,)),
            "wq_w": w((D, D)), "wq_b": bvec((D,)),
            "wkv_w": w((D, 2 * D)), "wkv_b": bvec((2 * D,)),
            "ca_proj_w": w((D, D)), "ca_proj_b": bvec((D,)),
            "fc1_w": w((D, mlp_h)), "fc1_b": bvec((mlp_h,)),
            "fc2_w": w((mlp_h, D)), "fc2_b": bvec((D,)),
            "ada_w": w((D, 6 * D)), "ada_b": bvec((6 * D,)),
        })
    return params


# ----------------------------------------------------------------------------
# Main
# ----------------------------------------------------------------------------

if __name__ == "__main__":
    cfg = dict(hidden=64, depth=2, T=8, heads=4, mlp_ratio=4.0, in_ch=6, freq=256)
    cfg["out_ch"] = cfg["in_ch"] * 2  # learn_sigma=True

    B, P = 2, 4

    key = jax.random.PRNGKey(0)
    kx, kt, ky, kp = jax.random.split(key, 4)
    x = jax.random.normal(kx, (B, cfg["in_ch"], cfg["T"]), jnp.float32)      # (B, C_in, T)
    t = jax.random.uniform(kt, (B,), jnp.float32, 0.0, 1000.0)               # (B,)
    y = jax.random.normal(ky, (B, cfg["T"], P, cfg["hidden"]), jnp.float32)  # (B, T, P, D)

    params = init_params(kp, cfg)

    out = dit_forward(params, x, t, y, cfg)
    out = jax.block_until_ready(out)

    assert out.shape == (B, cfg["out_ch"], cfg["T"]), out.shape
    assert bool(jnp.all(jnp.isfinite(out)))
    print("KERNEL_OK")
</pallas_src>

<mosaic_0001>
module attributes {stable_mosaic.version = 11 : i64} {
  func.func @kernel(%arg0: i32, %arg1: i32, %arg2: i32, %arg3: memref<16x6xf32, #tpu.memory_space<vmem>>, %arg4: memref<6x64xbf16, #tpu.memory_space<vmem>>, %arg5: memref<1x64xf32, #tpu.memory_space<vmem>>, %arg6: memref<16x64xf32, #tpu.memory_space<vmem>>, %arg7: memref<16x64xf32, #tpu.memory_space<vmem>>) attributes {dimension_semantics = [#tpu.dimension_semantics<parallel>, #tpu.dimension_semantics<parallel>, #tpu.dimension_semantics<arbitrary>], iteration_bounds = array<i64: 1, 1, 1>, scalar_prefetch = 0 : i64, scratch_operands = 1 : i64, tpu.core_type = #tpu.core_type<tc>, window_params = [{transform_indices = @transform_0, window_bounds = array<i64: 16, 6>}, {transform_indices = @transform_1, window_bounds = array<i64: 6, 64>}, {transform_indices = @transform_2, window_bounds = array<i64: 1, 64>}, {transform_indices = @transform_3, window_bounds = array<i64: 16, 64>}]} {
    %c0_i32 = arith.constant 0 : i32
    %0 = arith.cmpi eq, %arg2, %c0_i32 : i32
    %1 = arith.extui %0 : i1 to i32
    %c0_i32_0 = arith.constant 0 : i32
    %2 = arith.cmpi ne, %1, %c0_i32_0 : i32
    scf.if %2 {
      %cst_10 = arith.constant 0.000000e+00 : f32
      %13 = vector.broadcast %cst_10 : f32 to vector<16x64xf32>
      %c0_11 = arith.constant 0 : index
      %c0_12 = arith.constant 0 : index
      %14 = vector.load %arg7[%c0_11, %c0_12] : memref<16x64xf32, #tpu.memory_space<vmem>>, vector<16x64xf32>
      tpu.vector_store %arg7[%c0_11, %c0_12], %13 {strides = array<i32>} : memref<16x64xf32, #tpu.memory_space<vmem>>, vector<16x64xf32>,
    } else {
    }
    %c0 = arith.constant 0 : index
    %c0_1 = arith.constant 0 : index
    %3 = vector.load %arg3[%c0, %c0_1] : memref<16x6xf32, #tpu.memory_space<vmem>>, vector<16x6xf32>
    %4 = arith.truncf %3 : vector<16x6xf32> to vector<16x6xbf16>
    %c0_2 = arith.constant 0 : index
    %c0_3 = arith.constant 0 : index
    %5 = vector.load %arg4[%c0_2, %c0_3] : memref<6x64xbf16, #tpu.memory_space<vmem>>, vector<6x64xbf16>
    %c0_4 = arith.constant 0 : index
    %c0_5 = arith.constant 0 : index
    %6 = vector.load %arg7[%c0_4, %c0_5] : memref<16x64xf32, #tpu.memory_space<vmem>>, vector<16x64xf32>
    %cst = arith.constant dense<0.000000e+00> : vector<16x64xf32>
    %7 = tpu.matmul %4, %5, %cst {dimension_numbers = #tpu.dot_dimension_numbers<[1], [0], [0], [1], [0, 0, 1, 1], [], []>} : vector<16x6xbf16>, vector<6x64xbf16>, vector<16x64xf32> -> vector<16x64xf32>
    %8 = arith.addf %6, %7 : vector<16x64xf32>
    %c0_6 = arith.constant 0 : index
    %c0_7 = arith.constant 0 : index
    %9 = vector.load %arg7[%c0_6, %c0_7] : memref<16x64xf32, #tpu.memory_space<vmem>>, vector<16x64xf32>
    tpu.vector_store %arg7[%c0_6, %c0_7], %8 {strides = array<i32>} : memref<16x64xf32, #tpu.memory_space<vmem>>, vector<16x64xf32>,
    %c0_i32_8 = arith.constant 0 : i32
    %10 = arith.cmpi eq, %arg2, %c0_i32_8 : i32
    %11 = arith.extui %10 : i1 to i32
    %c0_i32_9 = arith.constant 0 : i32
    %12 = arith.cmpi ne, %11, %c0_i32_9 : i32
    scf.if %12 {
      %c0_10 = arith.constant 0 : index
      %c0_11 = arith.constant 0 : index
      %13 = vector.load %arg7[%c0_10, %c0_11] : memref<16x64xf32, #tpu.memory_space<vmem>>, vector<16x64xf32>
      %c0_12 = arith.constant 0 : index
      %c0_13 = arith.constant 0 : index
      %14 = vector.load %arg5[%c0_12, %c0_13] : memref<1x64xf32, #tpu.memory_space<vmem>>, vector<1x64xf32>
      %15 = vector.broadcast %14 : vector<1x64xf32> to vector<16x64xf32>
      %16 = arith.addf %13, %15 : vector<16x64xf32>
      %c0_14 = arith.constant 0 : index
      %c0_15 = arith.constant 0 : index
      %17 = vector.load %arg6[%c0_14, %c0_15] : memref<16x64xf32, #tpu.memory_space<vmem>>, vector<16x64xf32>
      tpu.vector_store %arg6[%c0_14, %c0_15], %16 {strides = array<i32>} : memref<16x64xf32, #tpu.memory_space<vmem>>, vector<16x64xf32>,
    } else {
    }
    return
  }
  func.func @transform_0(%arg0: i32, %arg1: i32, %arg2: i32) -> (i32, i32) {
    %c0_i32 = arith.constant 0 : i32
    return %arg0, %arg2 : i32, i32
  }
  func.func @transform_1(%arg0: i32, %arg1: i32, %arg2: i32) -> (i32, i32) {
    %c0_i32 = arith.constant 0 : i32
    return %arg2, %arg1 : i32, i32
  }
  func.func @transform_2(%arg0: i32, %arg1: i32, %arg2: i32) -> (i32, i32) {
    %c0_i32 = arith.constant 0 : i32
    %c0_i32_0 = arith.constant 0 : i32
    return %c0_i32, %arg1 : i32, i32
  }
  func.func @transform_3(%arg0: i32, %arg1: i32, %arg2: i32) -> (i32, i32) {
    %c0_i32 = arith.constant 0 : i32
    return %arg0, %arg1 : i32, i32
  }
}

</mosaic_0001>

<llo_original>
// kernel: tpu_custom_call.1
$region0: #{tpu_custom_call.1}
  #allocation0 [shape = 'u32[]', space=smem, size = 0x4, offset = 0x4, fixed_abs, tag = 'smem constant byte address 0x4 - core index']
  #allocation1 [shape = 'u32[144,128]{1,0:T(1,128)}', space=vmem, size = 0x12000, scoped, tag = 'internal scratch']
  #allocation2 [shape = 'f32[16,64]{1,0:T(8,128)}', space=vmem, size = 0x2000, scoped, tag = 'scratch operand']
  %s0 = inlined_call_operand.vmem [shape: f32[16,6], index: 0, kind: input, shape index: {}]
  %s1 = inlined_call_operand.vmem [shape: bf16[6,64], index: 1, kind: input, shape index: {}]
  %s2 = inlined_call_operand.vmem [shape: f32[1,64], index: 2, kind: input, shape index: {}]
  %s3 = inlined_call_operand.hbm [shape: f32[16,64], index: 3, kind: output, shape index: {}]
  %s4 = sld [smem:[#allocation0]]
  $region30: #{tpu_custom_call.1} parent=0
    _
  %s6 = ssub.s32 1, %s4
  %s7 = scalar_select 0, %s6, %s4
  $region1: #{tpu_custom_call.1} parent=0
    #allocation3 [shape = 'u8[8192]{0}', space=vmem, size = 0x2000, scoped, tag = 'output window, operand 0, single buffered']
    #allocation4 [shape = 's32[1]{0}', space=sflag, size = 0x4, scoped, tag = 'scoped memory for tpu_custom_call.1']
    %8 = vsyncpa [#allocation4], 0
    // Predicated region
    $region2: #{tpu_custom_call.1} parent=1 // pred_check
      _
    $region3: #{tpu_custom_call.1} parent=1 // pred_check_branch
      %10 = sbr.rel (0) target = $region5
    $region4: #{tpu_custom_call.1} parent=1 // pred_region
      _
    $region5: #{tpu_custom_call.1} parent=1 // pred_fallthru
      _
    // Predicated region
    $region6: #{tpu_custom_call.1} parent=1 // pred_check
      _
    $region7: #{tpu_custom_call.1} parent=1 // pred_check_branch
      %12 = sbr.rel (0) target = $region9
    $region8: #{tpu_custom_call.1} parent=1 // pred_region
      _
    $region9: #{tpu_custom_call.1} parent=1 // pred_fallthru
      _
    // Predicated region
    $region10: #{tpu_custom_call.1} parent=1 // pred_check
      _
    $region11: #{tpu_custom_call.1} parent=1 // pred_check_branch
      %14 = sbr.rel (0) target = $region13
    $region12: #{tpu_custom_call.1} parent=1 // pred_region
      _
    $region13: #{tpu_custom_call.1} parent=1 // pred_fallthru
      _
    %p16 = scmp.eq.s32.totalorder 0, 0
    // Predicated region
    $region14: #{tpu_custom_call.1} parent=1 // pred_check
      %p17 = pneg %p16
    $region15: #{tpu_custom_call.1} parent=1 // pred_check_branch
      %19 = sbr.rel (%p17) target = $region17
    $region16: #{tpu_custom_call.1} parent=1 // pred_region
      %vm20 = vcmask 523264
      %21 = vst.msk [vmem:[#allocation2] sm:$0xff] %vm20, 0.0
      %22 = vst.msk [vmem:[#allocation2 + $0x8] sm:$0xff] %vm20, 0.0
    $region17: #{tpu_custom_call.1} parent=1 // pred_fallthru
      _
    %v23 = vld [vmem:[%s0] sm:$0xff]
    %v24 = vld [vmem:[%s0 + $0x8] sm:$0xff]
    %v25 = vpack.c.bf16 %v24, %v23
    %v26 = vld [vmem:[%s1] sm:$0x7]
    %v27 = vld [vmem:[#allocation2] sm:$0xff]
    %v28 = vld [vmem:[#allocation2 + $0x8] sm:$0xff]
    %vm29 = vcmask 48128
    %v31 = vsel %vm29, %v25, 0
    %vm33 = vcmask 1042432
    %v35 = vsel %vm33, %v26, 0
    %37 = vmatprep.subr.bf16.mxu0 0
    %38 = vmatpush1.bf16.msra.mxu0 0
    %39 = vmatprep.subr.bf16.mxu0 0
    %40 = vmatpush1.bf16.msra.mxu0 0
    %41 = vmatprep.subr.bf16.mxu0 0
    %42 = vmatpush1.bf16.msra.mxu0 0
    %43 = vmatprep.subr.bf16.mxu0 0
    %44 = vmatpush1.bf16.msra.mxu0 0
    %45 = vmatprep.subr.bf16.mxu0 0
    %46 = vmatpush1.bf16.msra.mxu0 0
    %47 = vmatprep.subr.bf16.mxu0 0
    %48 = vmatpush1.bf16.msra.mxu0 0
    %49 = vmatprep.subr.bf16.mxu0 0
    %50 = vmatpush1.bf16.msra.mxu0 0
    %51 = vmatprep.subr.bf16.mxu0 0
    %52 = vmatpush1.bf16.msra.mxu0 %v35
    %53 = vmatprep.subr.bf16.mxu0 0
    %54 = vmatpush2.bf16.msra.mxu0 0
    %55 = vmatprep.subr.bf16.mxu0 0
    %56 = vmatpush2.bf16.msra.mxu0 0
    %57 = vmatprep.subr.bf16.mxu0 0
    %58 = vmatpush2.bf16.msra.mxu0 0
    %59 = vmatprep.subr.bf16.mxu0 0
    %60 = vmatpush2.bf16.msra.mxu0 0
    %61 = vmatprep.subr.bf16.mxu0 0
    %62 = vmatpush2.bf16.msra.mxu0 0
    %63 = vmatprep.subr.bf16.mxu0 0
    %64 = vmatpush2.bf16.msra.mxu0 0
    %65 = vmatprep.subr.bf16.mxu0 0
    %66 = vmatpush2.bf16.msra.mxu0 0
    %67 = vmatprep.subr.bf16.mxu0 0
    %68 = vmatpush2.bf16.msra.mxu0 0
    %69 = vmatprep.mubr.bf16.mxu0 0
    %70 = vmatmul.mubr.bf16.gmra.mxu0 %v31
    %v71 = vpop.f32.mrf.mxu0
    %v72 = vadd.f32 0.0, %v71
    %v73 = vpop.f32.mrf.mxu0
    %v74 = vpop.f32.mrf.mxu0
    %v75 = vadd.f32 0.0, %v74
    %v76 = vpop.f32.mrf.mxu0
    %77 = vdwg.mxu0
    %v78 = vadd.f32 %v27, %v72
    %v79 = vadd.f32 %v28, %v75
    %vm80 = vcmask 523264
    %81 = vst.msk [vmem:[#allocation2] sm:$0xff] %vm80, %v78
    %82 = vst.msk [vmem:[#allocation2 + $0x8] sm:$0xff] %vm80, %v79
    // Predicated region
    $region18: #{tpu_custom_call.1} parent=1 // pred_check
      %p83 = pneg %p16
    $region19: #{tpu_custom_call.1} parent=1 // pred_check_branch
      %85 = sbr.rel (%p83) target = $region21
    $region20: #{tpu_custom_call.1} parent=1 // pred_region
      %v86 = vld [vmem:[#allocation2] sm:$0xff]
      %v87 = vld [vmem:[#allocation2 + $0x8] sm:$0xff]
      %v88 = vld [vmem:[%s2] sm:$0x1]
      %v90 = vlaneseq
      %v91 = vshrl.u32 %v90, 7
      %v92 = vsub.s32 0, %v91
      %v93 = vrot.slane %v88, %v92
      %v95 = vadd.f32 %v86, %v93
      %v96 = vadd.f32 %v87, %v93
      %97 = vst.msk [vmem:[#allocation3] sm:$0xff] %vm80, %v95
      %98 = vst.msk [vmem:[#allocation3 + $0x8] sm:$0xff] %vm80, %v96
    $region21: #{tpu_custom_call.1} parent=1 // pred_fallthru
      _
    // Predicated region
    $region22: #{tpu_custom_call.1} parent=1 // pred_check
      _
    $region23: #{tpu_custom_call.1} parent=1 // pred_check_branch
      %100 = sbr.rel (0) target = $region25
    $region24: #{tpu_custom_call.1} parent=1 // pred_region
      %s102 = ssub.s32 256, 256
      %103 = vsyncadd [#allocation4], %s102
      %s104 = sshll.u32 [#allocation3], 4
      %s105 = int_to_ptr.vmem [resolvable:$true] %s104
      %110 = dma.vmem_to_hbm [thread:$0]  %s105, 256, %s3, [#allocation4], 128, 128, 8
    $region25: #{tpu_custom_call.1} parent=1 // pred_fallthru
      _
    // Predicated region
    $region26: #{tpu_custom_call.1} parent=1 // pred_check
      _
    $region27: #{tpu_custom_call.1} parent=1 // pred_check_branch
      %112 = sbr.rel (0) target = $region29
    $region28: #{tpu_custom_call.1} parent=1 // pred_region
      %113 = dma.done [#allocation4], 256
    $region29: #{tpu_custom_call.1} parent=1 // pred_fallthru
      _
    %114 = vsyncpa [#allocation4], 1

</llo_original>
